<compile_context>
chip_gen: v7x
topology: tpu7x:2x2x1
jax: 0.10.0
libtpu: 0.0.40
codegen_flags: <defaults>
</compile_context>

<pallas_src>
import jax
import jax.numpy as jnp
from jax.experimental import pallas as pl
from jax.experimental.pallas import tpu as pltpu


# ---------------------------------------------------------------------------
# Model / problem sizes (generator of the WGAN_GP module)
# ---------------------------------------------------------------------------
Z_DIM = 32                        # latent dimension (z_dim in WGAN_GP.__init__)
HIDDEN = 128                      # generator hidden width
IMG_C, IMG_H, IMG_W = 1, 16, 16
OUT_DIM = IMG_C * IMG_H * IMG_W   # 256 (lane-dense output)


# ---------------------------------------------------------------------------
# Pallas kernel: fused 3-layer MLP generator
# ---------------------------------------------------------------------------
def generator_kernel(z_ref, w1_ref, b1_ref, w2_ref, b2_ref, w3_ref, b3_ref,
                     o_ref):
    # z_ref: (TILE_B, Z_DIM) bf16; weights bf16 (grid-invariant blocks);
    # biases f32.  Matmuls accumulate in f32 on the MXU; bias add / ReLU /
    # tanh stay f32 (v5e-safe); output stored as bf16 (lane-dense 256 wide).
    z = z_ref[...]

    # Layer 1: Linear + ReLU (short K=32 contraction; MXU zero-pads K).
    h1 = jnp.dot(z, w1_ref[...], preferred_element_type=jnp.float32)
    h1 = jnp.maximum(h1 + b1_ref[...], 0.0)

    # Layer 2: Linear + ReLU.
    h2 = jnp.dot(h1.astype(w2_ref.dtype), w2_ref[...],
                 preferred_element_type=jnp.float32)
    h2 = jnp.maximum(h2 + b2_ref[...], 0.0)

    # Layer 3: Linear + tanh (EUP).
    h3 = jnp.dot(h2.astype(w3_ref.dtype), w3_ref[...],
                 preferred_element_type=jnp.float32)
    o_ref[...] = jnp.tanh(h3 + b3_ref[...]).astype(o_ref.dtype)


def _tiling(batch):
    """Return (padded_batch, batch_tile)."""
    if batch <= 128:
        # Tiny batches (e.g. the 10-row static noise): pad only to the bf16
        # sublane pack (16 rows) and run a single grid step.
        b_pad = max(16, ((batch + 15) // 16) * 16)
        return b_pad, b_pad
    # Larger batches: per-grid-step overhead (~0.35 us) dominates at small
    # tiles, so pick the largest tile in {1024, 512, 256} that still leaves
    # >= 2 grid steps (v7x's two TensorCores both get work); else fall back
    # to 128-row tiles with >= 2 steps.
    tile = 128
    for cand in (1024, 512, 256):
        if batch >= 2 * cand:
            tile = cand
            break
    b_pad = ((batch + tile - 1) // tile) * tile
    return b_pad, tile


@jax.jit
def wgan_gp_forward(z, params):
    """Pallas-backed WGAN_GP.forward(inputs): generator(z) -> (B, C, H, W) bf16."""
    w1, b1, w2, b2, w3, b3 = params           # f32 params, w: (fan_in, fan_out)
    B = z.shape[0]
    B_pad, tile = _tiling(B)

    # bf16 MXU operands; pad only the batch (directly in bf16, no extra f32
    # materialization).  Biases stay f32 and are added in-kernel.
    zb = z.astype(jnp.bfloat16)
    if B_pad != B:
        zb = jnp.pad(zb, ((0, B_pad - B), (0, 0)))
    w1b = w1.astype(jnp.bfloat16)
    w2b = w2.astype(jnp.bfloat16)
    w3b = w3.astype(jnp.bfloat16)

    weight_bytes = 2 * (Z_DIM * HIDDEN + HIDDEN * HIDDEN + HIDDEN * OUT_DIM) \
        + 4 * (HIDDEN + HIDDEN + OUT_DIM)
    cost = pl.CostEstimate(
        flops=2 * B_pad * (Z_DIM * HIDDEN + HIDDEN * HIDDEN + HIDDEN * OUT_DIM),
        transcendentals=B_pad * OUT_DIM,
        bytes_accessed=2 * B_pad * Z_DIM + 2 * B_pad * OUT_DIM + weight_bytes,
    )

    flat = pl.pallas_call(
        generator_kernel,
        out_shape=jax.ShapeDtypeStruct((B_pad, OUT_DIM), jnp.bfloat16),
        grid_spec=pltpu.PrefetchScalarGridSpec(
            num_scalar_prefetch=0,
            grid=(B_pad // tile,),
            in_specs=[
                pl.BlockSpec((tile, Z_DIM), lambda i: (i, 0)),        # z
                pl.BlockSpec((Z_DIM, HIDDEN), lambda i: (0, 0)),      # w1
                pl.BlockSpec((1, HIDDEN), lambda i: (0, 0)),          # b1
                pl.BlockSpec((HIDDEN, HIDDEN), lambda i: (0, 0)),     # w2
                pl.BlockSpec((1, HIDDEN), lambda i: (0, 0)),          # b2
                pl.BlockSpec((HIDDEN, OUT_DIM), lambda i: (0, 0)),    # w3
                pl.BlockSpec((1, OUT_DIM), lambda i: (0, 0)),         # b3
            ],
            out_specs=pl.BlockSpec((tile, OUT_DIM), lambda i: (i, 0)),
        ),
        compiler_params=pltpu.CompilerParams(
            dimension_semantics=("parallel",)),
        cost_estimate=cost,
    )(zb, w1b, b1, w2b, b2, w3b, b3)

    # Drop batch padding; NCHW output matching the PyTorch image convention.
    # Kept in bf16 (tanh output in [-1,1]); cast outside if f32 is required.
    return flat[:B].reshape(B, IMG_C, IMG_H, IMG_W)


# ---------------------------------------------------------------------------
# Deterministic parameter init (PyTorch nn.Linear default: U(-k, k),
# k = 1/sqrt(fan_in)) — synthetic weights, no checkpoint loading.
# ---------------------------------------------------------------------------
def init_params(key):
    def linear(key, fan_in, fan_out):
        kw, kb = jax.random.split(key)
        bound = 1.0 / jnp.sqrt(fan_in)
        w = jax.random.uniform(kw, (fan_in, fan_out), jnp.float32, -bound, bound)
        b = jax.random.uniform(kb, (1, fan_out), jnp.float32, -bound, bound)
        return w, b

    k1, k2, k3 = jax.random.split(key, 3)
    w1, b1 = linear(k1, Z_DIM, HIDDEN)
    w2, b2 = linear(k2, HIDDEN, HIDDEN)
    w3, b3 = linear(k3, HIDDEN, OUT_DIM)
    return (w1, b1, w2, b2, w3, b3)


def reference_forward(z, params):
    """Pure-JAX f32 reference for correctness checking."""
    w1, b1, w2, b2, w3, b3 = params
    h1 = jnp.maximum(z @ w1 + b1, 0.0)
    h2 = jnp.maximum(h1 @ w2 + b2, 0.0)
    out = jnp.tanh(h2 @ w3 + b3)
    return out.reshape(z.shape[0], IMG_C, IMG_H, IMG_W)


if __name__ == "__main__":
    key = jax.random.PRNGKey(0)
    k_params, k_noise = jax.random.split(key)

    params = init_params(k_params)
    BATCH = 10                        # matches static_random_noise = randn(10, z_dim)
    z = jax.random.normal(k_noise, (BATCH, Z_DIM), jnp.float32)

    out = wgan_gp_forward(z, params)
    out = jax.block_until_ready(out)

    ref = reference_forward(z, params)
    assert out.shape == (BATCH, IMG_C, IMG_H, IMG_W)
    # bf16 MXU operands + bf16 output with f32 accumulation vs. pure-f32 ref.
    assert jnp.allclose(out.astype(jnp.float32), ref, atol=5e-2, rtol=0.0)

    print("KERNEL_OK")
</pallas_src>

<mosaic_0001>
module attributes {stable_mosaic.version = 11 : i64} {
  func.func @generator_kernel(%arg0: i32, %arg1: memref<16x32xbf16, #tpu.memory_space<vmem>>, %arg2: memref<32x128xbf16, #tpu.memory_space<vmem>>, %arg3: memref<1x128xf32, #tpu.memory_space<vmem>>, %arg4: memref<128x128xbf16, #tpu.memory_space<vmem>>, %arg5: memref<1x128xf32, #tpu.memory_space<vmem>>, %arg6: memref<128x256xbf16, #tpu.memory_space<vmem>>, %arg7: memref<1x256xf32, #tpu.memory_space<vmem>>, %arg8: memref<16x256xbf16, #tpu.memory_space<vmem>>) attributes {dimension_semantics = [#tpu.dimension_semantics<parallel>], iteration_bounds = array<i64: 1>, scalar_prefetch = 0 : i64, scratch_operands = 0 : i64, tpu.core_type = #tpu.core_type<tc>, window_params = [{transform_indices = @transform_0, window_bounds = array<i64: 16, 32>}, {pipeline_mode = #tpu.pipeline_mode<synchronous>, transform_indices = @transform_1, window_bounds = array<i64: 32, 128>}, {pipeline_mode = #tpu.pipeline_mode<synchronous>, transform_indices = @transform_2, window_bounds = array<i64: 1, 128>}, {pipeline_mode = #tpu.pipeline_mode<synchronous>, transform_indices = @transform_3, window_bounds = array<i64: 128, 128>}, {pipeline_mode = #tpu.pipeline_mode<synchronous>, transform_indices = @transform_4, window_bounds = array<i64: 1, 128>}, {pipeline_mode = #tpu.pipeline_mode<synchronous>, transform_indices = @transform_5, window_bounds = array<i64: 128, 256>}, {pipeline_mode = #tpu.pipeline_mode<synchronous>, transform_indices = @transform_6, window_bounds = array<i64: 1, 256>}, {transform_indices = @transform_7, window_bounds = array<i64: 16, 256>}]} {
    %c0 = arith.constant 0 : index
    %c0_0 = arith.constant 0 : index
    %0 = vector.load %arg1[%c0, %c0_0] : memref<16x32xbf16, #tpu.memory_space<vmem>>, vector<16x32xbf16>
    %c0_1 = arith.constant 0 : index
    %c0_2 = arith.constant 0 : index
    %1 = vector.load %arg2[%c0_1, %c0_2] : memref<32x128xbf16, #tpu.memory_space<vmem>>, vector<32x128xbf16>
    %cst = arith.constant dense<0.000000e+00> : vector<16x128xf32>
    %2 = tpu.matmul %0, %1, %cst {dimension_numbers = #tpu.dot_dimension_numbers<[1], [0], [0], [1], [0, 0, 1, 1], [], []>} : vector<16x32xbf16>, vector<32x128xbf16>, vector<16x128xf32> -> vector<16x128xf32>
    %c0_3 = arith.constant 0 : index
    %c0_4 = arith.constant 0 : index
    %3 = vector.load %arg3[%c0_3, %c0_4] : memref<1x128xf32, #tpu.memory_space<vmem>>, vector<1x128xf32>
    %4 = vector.broadcast %3 : vector<1x128xf32> to vector<16x128xf32>
    %5 = arith.addf %2, %4 : vector<16x128xf32>
    %cst_5 = arith.constant 0.000000e+00 : f32
    %6 = vector.broadcast %cst_5 : f32 to vector<16x128xf32>
    %7 = arith.maximumf %5, %6 : vector<16x128xf32>
    %8 = arith.truncf %7 : vector<16x128xf32> to vector<16x128xbf16>
    %c0_6 = arith.constant 0 : index
    %c0_7 = arith.constant 0 : index
    %9 = vector.load %arg4[%c0_6, %c0_7] : memref<128x128xbf16, #tpu.memory_space<vmem>>, vector<128x128xbf16>
    %cst_8 = arith.constant dense<0.000000e+00> : vector<16x128xf32>
    %10 = tpu.matmul %8, %9, %cst_8 {dimension_numbers = #tpu.dot_dimension_numbers<[1], [0], [0], [1], [0, 0, 1, 1], [], []>} : vector<16x128xbf16>, vector<128x128xbf16>, vector<16x128xf32> -> vector<16x128xf32>
    %c0_9 = arith.constant 0 : index
    %c0_10 = arith.constant 0 : index
    %11 = vector.load %arg5[%c0_9, %c0_10] : memref<1x128xf32, #tpu.memory_space<vmem>>, vector<1x128xf32>
    %12 = vector.broadcast %11 : vector<1x128xf32> to vector<16x128xf32>
    %13 = arith.addf %10, %12 : vector<16x128xf32>
    %cst_11 = arith.constant 0.000000e+00 : f32
    %14 = vector.broadcast %cst_11 : f32 to vector<16x128xf32>
    %15 = arith.maximumf %13, %14 : vector<16x128xf32>
    %16 = arith.truncf %15 : vector<16x128xf32> to vector<16x128xbf16>
    %c0_12 = arith.constant 0 : index
    %c0_13 = arith.constant 0 : index
    %17 = vector.load %arg6[%c0_12, %c0_13] : memref<128x256xbf16, #tpu.memory_space<vmem>>, vector<128x256xbf16>
    %cst_14 = arith.constant dense<0.000000e+00> : vector<16x256xf32>
    %18 = tpu.matmul %16, %17, %cst_14 {dimension_numbers = #tpu.dot_dimension_numbers<[1], [0], [0], [1], [0, 0, 1, 1], [], []>} : vector<16x128xbf16>, vector<128x256xbf16>, vector<16x256xf32> -> vector<16x256xf32>
    %c0_15 = arith.constant 0 : index
    %c0_16 = arith.constant 0 : index
    %19 = vector.load %arg7[%c0_15, %c0_16] : memref<1x256xf32, #tpu.memory_space<vmem>>, vector<1x256xf32>
    %20 = vector.broadcast %19 : vector<1x256xf32> to vector<16x256xf32>
    %21 = arith.addf %18, %20 : vector<16x256xf32>
    %22 = math.tanh %21 : vector<16x256xf32>
    %23 = arith.truncf %22 : vector<16x256xf32> to vector<16x256xbf16>
    %c0_17 = arith.constant 0 : index
    %c0_18 = arith.constant 0 : index
    %24 = vector.load %arg8[%c0_17, %c0_18] : memref<16x256xbf16, #tpu.memory_space<vmem>>, vector<16x256xbf16>
    tpu.vector_store %arg8[%c0_17, %c0_18], %23 {strides = array<i32>} : memref<16x256xbf16, #tpu.memory_space<vmem>>, vector<16x256xbf16>,
    return
  }
  func.func @transform_0(%arg0: i32) -> (i32, i32) {
    %c0_i32 = arith.constant 0 : i32
    %c0_i32_0 = arith.constant 0 : i32
    return %arg0, %c0_i32 : i32, i32
  }
  func.func @transform_1(%arg0: i32) -> (i32, i32) {
    %c0_i32 = arith.constant 0 : i32
    %c0_i32_0 = arith.constant 0 : i32
    %c0_i32_1 = arith.constant 0 : i32
    return %c0_i32, %c0_i32_0 : i32, i32
  }
  func.func @transform_2(%arg0: i32) -> (i32, i32) {
    %c0_i32 = arith.constant 0 : i32
    %c0_i32_0 = arith.constant 0 : i32
    %c0_i32_1 = arith.constant 0 : i32
    return %c0_i32, %c0_i32_0 : i32, i32
  }
  func.func @transform_3(%arg0: i32) -> (i32, i32) {
    %c0_i32 = arith.constant 0 : i32
    %c0_i32_0 = arith.constant 0 : i32
    %c0_i32_1 = arith.constant 0 : i32
    return %c0_i32, %c0_i32_0 : i32, i32
  }
  func.func @transform_4(%arg0: i32) -> (i32, i32) {
    %c0_i32 = arith.constant 0 : i32
    %c0_i32_0 = arith.constant 0 : i32
    %c0_i32_1 = arith.constant 0 : i32
    return %c0_i32, %c0_i32_0 : i32, i32
  }
  func.func @transform_5(%arg0: i32) -> (i32, i32) {
    %c0_i32 = arith.constant 0 : i32
    %c0_i32_0 = arith.constant 0 : i32
    %c0_i32_1 = arith.constant 0 : i32
    return %c0_i32, %c0_i32_0 : i32, i32
  }
  func.func @transform_6(%arg0: i32) -> (i32, i32) {
    %c0_i32 = arith.constant 0 : i32
    %c0_i32_0 = arith.constant 0 : i32
    %c0_i32_1 = arith.constant 0 : i32
    return %c0_i32, %c0_i32_0 : i32, i32
  }
  func.func @transform_7(%arg0: i32) -> (i32, i32) {
    %c0_i32 = arith.constant 0 : i32
    %c0_i32_0 = arith.constant 0 : i32
    return %arg0, %c0_i32 : i32, i32
  }
}

</mosaic_0001>

<llo_original>
// kernel: wgan_gp_forward.1
$region0: #{wgan_gp_forward.1}
  #allocation0 [shape = 'u32[]', space=smem, size = 0x4, offset = 0x4, fixed_abs, tag = 'smem constant byte address 0x4 - core index']
  #allocation1 [shape = 'u32[144,128]{1,0:T(1,128)}', space=vmem, size = 0x12000, scoped, tag = 'internal scratch']
  %s0 = inlined_call_operand.vmem [shape: bf16[16,32], index: 0, kind: input, shape index: {}]
  %s1 = inlined_call_operand.vmem [shape: bf16[32,128], index: 1, kind: input, shape index: {}]
  %s2 = inlined_call_operand.vmem [shape: f32[1,128], index: 2, kind: input, shape index: {}]
  %s3 = inlined_call_operand.vmem [shape: bf16[128,128], index: 3, kind: input, shape index: {}]
  %s4 = inlined_call_operand.vmem [shape: f32[1,128], index: 4, kind: input, shape index: {}]
  %s5 = inlined_call_operand.vmem [shape: bf16[128,256], index: 5, kind: input, shape index: {}]
  %s6 = inlined_call_operand.vmem [shape: f32[1,256], index: 6, kind: input, shape index: {}]
  %s7 = inlined_call_operand.vmem [shape: bf16[16,256], index: 7, kind: output, shape index: {}]
  %s8 = sld [smem:[#allocation0]]
  $region38: #{wgan_gp_forward.1} parent=0
    _
  %s10 = ssub.s32 1, %s8
  %s11 = scalar_select 0, %s10, %s8
  // Predicated region
  $region2: #{wgan_gp_forward.1} parent=0 // pred_check
    _
  $region3: #{wgan_gp_forward.1} parent=0 // pred_check_branch
    %13 = sbr.rel (0) target = $region5
  $region4: #{wgan_gp_forward.1} parent=0 // pred_region
    _
  $region5: #{wgan_gp_forward.1} parent=0 // pred_fallthru
    _
  // Predicated region
  $region6: #{wgan_gp_forward.1} parent=0 // pred_check
    _
  $region7: #{wgan_gp_forward.1} parent=0 // pred_check_branch
    %15 = sbr.rel (0) target = $region9
  $region8: #{wgan_gp_forward.1} parent=0 // pred_region
    _
  $region9: #{wgan_gp_forward.1} parent=0 // pred_fallthru
    _
  // Predicated region
  $region10: #{wgan_gp_forward.1} parent=0 // pred_check
    _
  $region11: #{wgan_gp_forward.1} parent=0 // pred_check_branch
    %17 = sbr.rel (0) target = $region13
  $region12: #{wgan_gp_forward.1} parent=0 // pred_region
    _
  $region13: #{wgan_gp_forward.1} parent=0 // pred_fallthru
    _
  // Predicated region
  $region14: #{wgan_gp_forward.1} parent=0 // pred_check
    _
  $region15: #{wgan_gp_forward.1} parent=0 // pred_check_branch
    %19 = sbr.rel (0) target = $region17
  $region16: #{wgan_gp_forward.1} parent=0 // pred_region
    _
  $region17: #{wgan_gp_forward.1} parent=0 // pred_fallthru
    _
  // Predicated region
  $region18: #{wgan_gp_forward.1} parent=0 // pred_check
    _
  $region19: #{wgan_gp_forward.1} parent=0 // pred_check_branch
    %21 = sbr.rel (0) target = $region21
  $region20: #{wgan_gp_forward.1} parent=0 // pred_region
    _
  $region21: #{wgan_gp_forward.1} parent=0 // pred_fallthru
    _
  // Predicated region
  $region22: #{wgan_gp_forward.1} parent=0 // pred_check
    _
  $region23: #{wgan_gp_forward.1} parent=0 // pred_check_branch
    %23 = sbr.rel (0) target = $region25
  $region24: #{wgan_gp_forward.1} parent=0 // pred_region
    _
  $region25: #{wgan_gp_forward.1} parent=0 // pred_fallthru
    _
  // Predicated region
  $region26: #{wgan_gp_forward.1} parent=0 // pred_check
    _
  $region27: #{wgan_gp_forward.1} parent=0 // pred_check_branch
    %25 = sbr.rel (0) target = $region29
  $region28: #{wgan_gp_forward.1} parent=0 // pred_region
    _
  $region29: #{wgan_gp_forward.1} parent=0 // pred_fallthru
    _
  %v27 = vld [vmem:[%s0] sm:$0xf]
  %v28 = vld [vmem:[%s0 + $0x4] sm:$0xf]
  %v29 = vld [vmem:[%s1] sm:$0xf]
  %v30 = vld [vmem:[%s1 + $0x4] sm:$0xf]
  %v31 = vld [vmem:[%s1 + $0x8] sm:$0xf]
  %v32 = vld [vmem:[%s1 + $0xc] sm:$0xf]
  %v33 = vld [vmem:[%s2] sm:$0x1]
  %v35 = vlaneseq
  %v36 = vshrl.u32 %v35, 7
  %v37 = vsub.s32 0, %v36
  %v38 = vrot.slane %v33, %v37
  %v42 = vunpack.c.l.b16 %v27
  %v43 = vunpack.c.l.b16 %v28
  %v44 = vpack.c.b16 %v43, %v42
  %v49 = vunpack.c.l.b16 %v29
  %v50 = vunpack.c.l.b16 %v30
  %v51 = vunpack.c.l.b16 %v31
  %v52 = vunpack.c.l.b16 %v32
  %v53 = vpack.c.b16 %v50, %v49
  %v54 = vpack.c.b16 %v52, %v51
  %vm57 = vcmask 261120
  %v59 = vsel %vm57, %v44, 0
  %61 = vmatprep.subr.bf16.mxu0 0
  %62 = vmatpush1.bf16.msra.mxu0 %v53
  %63 = vmatprep.subr.bf16.mxu0 0
  %64 = vmatpush1.bf16.msra.mxu0 %v54
  %65 = vmatprep.subr.bf16.mxu0 0
  %66 = vmatpush1.bf16.msra.mxu0 0
  %67 = vmatprep.subr.bf16.mxu0 0
  %68 = vmatpush1.bf16.msra.mxu0 0
  %69 = vmatprep.subr.bf16.mxu0 0
  %70 = vmatpush1.bf16.msra.mxu0 0
  %71 = vmatprep.subr.bf16.mxu0 0
  %72 = vmatpush1.bf16.msra.mxu0 0
  %73 = vmatprep.subr.bf16.mxu0 0
  %74 = vmatpush1.bf16.msra.mxu0 0
  %75 = vmatprep.subr.bf16.mxu0 0
  %76 = vmatpush1.bf16.msra.mxu0 0
  %77 = vmatprep.subr.bf16.mxu0 0
  %78 = vmatpush1.bf16.msra.mxu0 0
  %79 = vmatprep.subr.bf16.mxu0 0
  %80 = vmatpush1.bf16.msra.mxu0 0
  %81 = vmatprep.subr.bf16.mxu0 0
  %82 = vmatpush1.bf16.msra.mxu0 0
  %83 = vmatprep.subr.bf16.mxu0 0
  %84 = vmatpush1.bf16.msra.mxu0 0
  %85 = vmatprep.subr.bf16.mxu0 0
  %86 = vmatpush1.bf16.msra.mxu0 0
  %87 = vmatprep.subr.bf16.mxu0 0
  %88 = vmatpush1.bf16.msra.mxu0 0
  %89 = vmatprep.subr.bf16.mxu0 0
  %90 = vmatpush1.bf16.msra.mxu0 0
  %91 = vmatprep.subr.bf16.mxu0 0
  %92 = vmatpush1.bf16.msra.mxu0 0
  %93 = vmatprep.mubr.bf16.mxu0 0
  %94 = vmatmul.mubr.bf16.gmra.mrb[0].mxu0 %v59
  %v95 = vpop.f32.mrb[0].mxu0
  %v96 = vadd.f32 %v38, %v95
  %v97 = vpop.f32.mrb[0].mxu0
  %v98 = vpop.f32.mrb[0].mxu0
  %v99 = vadd.f32 %v38, %v98
  %v100 = vpop.f32.mrb[0].mxu0
  %101 = vdwg.mxu0
  %v102 = vmax.f32 %v96, 0.0
  %v103 = vmax.f32 %v99, 0.0
  %v104 = vpack.c.bf16 %v103, %v102
  %v105 = vld [vmem:[%s3] sm:$0xf]
  %v106 = vld [vmem:[%s3 + $0x4] sm:$0xf]
  %v107 = vld [vmem:[%s3 + $0x8] sm:$0xf]
  %v108 = vld [vmem:[%s3 + $0xc] sm:$0xf]
  %v109 = vld [vmem:[%s3 + $0x10] sm:$0xf]
  %v110 = vld [vmem:[%s3 + $0x14] sm:$0xf]
  %v111 = vld [vmem:[%s3 + $0x18] sm:$0xf]
  %v112 = vld [vmem:[%s3 + $0x1c] sm:$0xf]
  %v113 = vld [vmem:[%s3 + $0x20] sm:$0xf]
  %v114 = vld [vmem:[%s3 + $0x24] sm:$0xf]
  %v115 = vld [vmem:[%s3 + $0x28] sm:$0xf]
  %v116 = vld [vmem:[%s3 + $0x2c] sm:$0xf]
  %v117 = vld [vmem:[%s3 + $0x30] sm:$0xf]
  %v118 = vld [vmem:[%s3 + $0x34] sm:$0xf]
  %v119 = vld [vmem:[%s3 + $0x38] sm:$0xf]
  %v120 = vld [vmem:[%s3 + $0x3c] sm:$0xf]
  %v121 = vld [vmem:[%s4] sm:$0x1]
  %v123 = vlaneseq
  %v124 = vshrl.u32 %v123, 7
  %v125 = vsub.s32 0, %v124
  %v126 = vrot.slane %v121, %v125
  %v144 = vunpack.c.l.b16 %v105
  %v145 = vunpack.c.l.b16 %v106
  %v146 = vunpack.c.l.b16 %v107
  %v147 = vunpack.c.l.b16 %v108
  %v148 = vunpack.c.l.b16 %v109
  %v149 = vunpack.c.l.b16 %v110
  %v150 = vunpack.c.l.b16 %v111
  %v151 = vunpack.c.l.b16 %v112
  %v152 = vunpack.c.l.b16 %v113
  %v153 = vunpack.c.l.b16 %v114
  %v154 = vunpack.c.l.b16 %v115
  %v155 = vunpack.c.l.b16 %v116
  %v156 = vunpack.c.l.b16 %v117
  %v157 = vunpack.c.l.b16 %v118
  %v158 = vunpack.c.l.b16 %v119
  %v159 = vunpack.c.l.b16 %v120
  %v160 = vpack.c.b16 %v145, %v144
  %v161 = vpack.c.b16 %v147, %v146
  %v162 = vpack.c.b16 %v149, %v148
  %v163 = vpack.c.b16 %v151, %v150
  %v164 = vpack.c.b16 %v153, %v152
  %v165 = vpack.c.b16 %v155, %v154
  %v166 = vpack.c.b16 %v157, %v156
  %v167 = vpack.c.b16 %v159, %v158
  %176 = vmatprep.subr.bf16.mxu0 0
  %177 = vmatpush1.bf16.msra.mxu0 %v160
  %178 = vmatprep.subr.bf16.mxu0 0
  %179 = vmatpush1.bf16.msra.mxu0 %v161
  %180 = vmatprep.subr.bf16.mxu0 0
  %181 = vmatpush1.bf16.msra.mxu0 %v162
  %182 = vmatprep.subr.bf16.mxu0 0
  %183 = vmatpush1.bf16.msra.mxu0 %v163
  %184 = vmatprep.subr.bf16.mxu0 0
  %185 = vmatpush1.bf16.msra.mxu0 %v164
  %186 = vmatprep.subr.bf16.mxu0 0
  %187 = vmatpush1.bf16.msra.mxu0 %v165
  %188 = vmatprep.subr.bf16.mxu0 0
  %189 = vmatpush1.bf16.msra.mxu0 %v166
  %190 = vmatprep.subr.bf16.mxu0 0
  %191 = vmatpush1.bf16.msra.mxu0 %v167
  %192 = vmatprep.subr.bf16.mxu0 0
  %193 = vmatpush1.bf16.msra.mxu0 0
  %194 = vmatprep.subr.bf16.mxu0 0
  %195 = vmatpush1.bf16.msra.mxu0 0
  %196 = vmatprep.subr.bf16.mxu0 0
  %197 = vmatpush1.bf16.msra.mxu0 0
  %198 = vmatprep.subr.bf16.mxu0 0
  %199 = vmatpush1.bf16.msra.mxu0 0
  %200 = vmatprep.subr.bf16.mxu0 0
  %201 = vmatpush1.bf16.msra.mxu0 0
  %202 = vmatprep.subr.bf16.mxu0 0
  %203 = vmatpush1.bf16.msra.mxu0 0
  %204 = vmatprep.subr.bf16.mxu0 0
  %205 = vmatpush1.bf16.msra.mxu0 0
  %206 = vmatprep.subr.bf16.mxu0 0
  %207 = vmatpush1.bf16.msra.mxu0 0
  %208 = vmatprep.mubr.bf16.mxu0 0
  %209 = vmatmul.mubr.bf16.gmra.mrb[0].mxu0 %v104
  %v210 = vpop.f32.mrb[0].mxu0
  %v211 = vadd.f32 %v126, %v210
  %v212 = vpop.f32.mrb[0].mxu0
  %v213 = vpop.f32.mrb[0].mxu0
  %v214 = vadd.f32 %v126, %v213
  %v215 = vpop.f32.mrb[0].mxu0
  %216 = vdwg.mxu0
  %v217 = vmax.f32 %v211, 0.0
  %v218 = vmax.f32 %v214, 0.0
  %v219 = vpack.c.bf16 %v218, %v217
  %v220 = vld [vmem:[%s5] sm:$0xff]
  %v221 = vld [vmem:[%s5 + $0x8] sm:$0xff]
  %v222 = vld [vmem:[%s5 + $0x10] sm:$0xff]
  %v223 = vld [vmem:[%s5 + $0x18] sm:$0xff]
  %v224 = vld [vmem:[%s5 + $0x20] sm:$0xff]
  %v225 = vld [vmem:[%s5 + $0x28] sm:$0xff]
  %v226 = vld [vmem:[%s5 + $0x30] sm:$0xff]
  %v227 = vld [vmem:[%s5 + $0x38] sm:$0xff]
  %v228 = vld [vmem:[%s5 + $0x40] sm:$0xff]
  %v229 = vld [vmem:[%s5 + $0x48] sm:$0xff]
  %v230 = vld [vmem:[%s5 + $0x50] sm:$0xff]
  %v231 = vld [vmem:[%s5 + $0x58] sm:$0xff]
  %v232 = vld [vmem:[%s5 + $0x60] sm:$0xff]
  %v233 = vld [vmem:[%s5 + $0x68] sm:$0xff]
  %v234 = vld [vmem:[%s5 + $0x70] sm:$0xff]
  %v235 = vld [vmem:[%s5 + $0x78] sm:$0xff]
  %v236 = vld [vmem:[%s6] sm:$0x3]
  %v238 = vlaneseq
  %v239 = vshrl.u32 %v238, 7
  %v240 = vsub.s32 0, %v239
  %v241 = vrot.slane %v236, %v240
  %v242 = vlaneseq
  %v243 = vshrl.u32 %v242, 7
  %v244 = vsub.s32 1, %v243
  %v245 = vrot.slane %v236, %v244
  %v264 = vunpack.c.l.b16 %v220
  %v265 = vunpack.c.h.b16 %v220
  %v266 = vunpack.c.l.b16 %v221
  %v267 = vunpack.c.h.b16 %v221
  %v268 = vunpack.c.l.b16 %v222
  %v269 = vunpack.c.h.b16 %v222
  %v270 = vunpack.c.l.b16 %v223
  %v271 = vunpack.c.h.b16 %v223
  %v272 = vunpack.c.l.b16 %v224
  %v273 = vunpack.c.h.b16 %v224
  %v274 = vunpack.c.l.b16 %v225
  %v275 = vunpack.c.h.b16 %v225
  %v276 = vunpack.c.l.b16 %v226
  %v277 = vunpack.c.h.b16 %v226
  %v278 = vunpack.c.l.b16 %v227
  %v279 = vunpack.c.h.b16 %v227
  %v280 = vunpack.c.l.b16 %v228
  %v281 = vunpack.c.h.b16 %v228
  %v282 = vunpack.c.l.b16 %v229
  %v283 = vunpack.c.h.b16 %v229
  %v284 = vunpack.c.l.b16 %v230
  %v285 = vunpack.c.h.b16 %v230
  %v286 = vunpack.c.l.b16 %v231
  %v287 = vunpack.c.h.b16 %v231
  %v288 = vunpack.c.l.b16 %v232
  %v289 = vunpack.c.h.b16 %v232
  %v290 = vunpack.c.l.b16 %v233
  %v291 = vunpack.c.h.b16 %v233
  %v292 = vunpack.c.l.b16 %v234
  %v293 = vunpack.c.h.b16 %v234
  %v294 = vunpack.c.l.b16 %v235
  %v295 = vunpack.c.h.b16 %v235
  %v296 = vpack.c.b16 %v266, %v264
  %v297 = vpack.c.b16 %v267, %v265
  %v298 = vpack.c.b16 %v270, %v268
  %v299 = vpack.c.b16 %v271, %v269
  %v300 = vpack.c.b16 %v274, %v272
  %v301 = vpack.c.b16 %v275, %v273
  %v302 = vpack.c.b16 %v278, %v276
  %v303 = vpack.c.b16 %v279, %v277
  %v304 = vpack.c.b16 %v282, %v280
  %v305 = vpack.c.b16 %v283, %v281
  %v306 = vpack.c.b16 %v286, %v284
  %v307 = vpack.c.b16 %v287, %v285
  %v308 = vpack.c.b16 %v290, %v288
  %v309 = vpack.c.b16 %v291, %v289
  %v310 = vpack.c.b16 %v294, %v292
  %v311 = vpack.c.b16 %v295, %v293
  %328 = vmatprep.subr.bf16.mxu0 %v297
  %329 = vmatpush1.bf16.msra.mxu0 %v296
  %330 = vmatprep.subr.bf16.mxu0 %v299
  %331 = vmatpush1.bf16.msra.mxu0 %v298
  %332 = vmatprep.subr.bf16.mxu0 %v301
  %333 = vmatpush1.bf16.msra.mxu0 %v300
  %334 = vmatprep.subr.bf16.mxu0 %v303
  %335 = vmatpush1.bf16.msra.mxu0 %v302
  %336 = vmatprep.subr.bf16.mxu0 %v305
  %337 = vmatpush1.bf16.msra.mxu0 %v304
  %338 = vmatprep.subr.bf16.mxu0 %v307
  %339 = vmatpush1.bf16.msra.mxu0 %v306
  %340 = vmatprep.subr.bf16.mxu0 %v309
  %341 = vmatpush1.bf16.msra.mxu0 %v308
  %342 = vmatprep.subr.bf16.mxu0 %v311
  %343 = vmatpush1.bf16.msra.mxu0 %v310
  %344 = vmatprep.subr.bf16.mxu0 0
  %345 = vmatpush1.bf16.msra.mxu0 0
  %346 = vmatprep.subr.bf16.mxu0 0
  %347 = vmatpush1.bf16.msra.mxu0 0
  %348 = vmatprep.subr.bf16.mxu0 0
  %349 = vmatpush1.bf16.msra.mxu0 0
  %350 = vmatprep.subr.bf16.mxu0 0
  %351 = vmatpush1.bf16.msra.mxu0 0
  %352 = vmatprep.subr.bf16.mxu0 0
  %353 = vmatpush1.bf16.msra.mxu0 0
  %354 = vmatprep.subr.bf16.mxu0 0
  %355 = vmatpush1.bf16.msra.mxu0 0
  %356 = vmatprep.subr.bf16.mxu0 0
  %357 = vmatpush1.bf16.msra.mxu0 0
  %358 = vmatprep.subr.bf16.mxu0 0
  %359 = vmatpush1.bf16.msra.mxu0 0
  %360 = vmatprep.mubr.bf16.mxu0 0
  %361 = vmatmul.mubr.bf16.gmra.mrb[0].mxu0 %v219
  %v362 = vpop.f32.mrb[0].mxu0
  %v363 = vadd.f32 %v241, %v362
  %v364 = vpop.f32.mrb[0].mxu0
  %v365 = vadd.f32 %v245, %v364
  %v366 = vpop.f32.mrb[0].mxu0
  %v367 = vadd.f32 %v241, %v366
  %v368 = vpop.f32.mrb[0].mxu0
  %v369 = vadd.f32 %v245, %v368
  %370 = vdwg.mxu0
  %v371 = vtanh.pop %v363
  %v372 = vtanh.pop %v365
  %v373 = vtanh.pop %v367
  %v374 = vtanh.pop %v369
  %v375 = vpack.c.bf16 %v373, %v371
  %v376 = vpack.c.bf16 %v374, %v372
  %v379 = vunpack.c.l.b16 %v375
  %v380 = vunpack.c.l.b16 %v376
  %v381 = vunpack.c.h.b16 %v375
  %v382 = vunpack.c.h.b16 %v376
  %v383 = vpack.c.b16 %v380, %v379
  %v384 = vpack.c.b16 %v382, %v381
  %387 = vst [vmem:[%s7] sm:$0xff] %v383
  %388 = vst [vmem:[%s7 + $0x8] sm:$0xff] %v384
  // Predicated region
  $region30: #{wgan_gp_forward.1} parent=0 // pred_check
    _
  $region31: #{wgan_gp_forward.1} parent=0 // pred_check_branch
    %390 = sbr.rel (0) target = $region33
  $region32: #{wgan_gp_forward.1} parent=0 // pred_region
    _
  $region33: #{wgan_gp_forward.1} parent=0 // pred_fallthru
    _
  // Predicated region
  $region34: #{wgan_gp_forward.1} parent=0 // pred_check
    _
  $region35: #{wgan_gp_forward.1} parent=0 // pred_check_branch
    %392 = sbr.rel (0) target = $region37
  $region36: #{wgan_gp_forward.1} parent=0 // pred_region
    _
  $region37: #{wgan_gp_forward.1} parent=0 // pred_fallthru
    _

</llo_original>
